<compile_context>
chip_gen: v5e
topology: v5e:2x2
jax: 0.10.0
libtpu: 0.0.40
codegen_flags: <defaults>
</compile_context>

<pallas_src>
import functools

import jax
import jax.numpy as jnp
import numpy as np
from jax.experimental import pallas as pl
from jax.experimental.pallas import tpu as pltpu


_VMEM = pl.BlockSpec(memory_space=pltpu.MemorySpace.VMEM)
_SMEM = pl.BlockSpec(memory_space=pltpu.MemorySpace.SMEM)


def _round_up(x, m):
    return ((x + m - 1) // m) * m


# ------------------------------- fused kernel --------------------------------


def _clip_fused_kernel(
    scale_ref,      # (1, 1)          f32  SMEM   exp(logit_scale)
    patches_ref,    # (B*P, Dp)       bf16 VMEM   flattened image patches (unpadded)
    vis_w1_ref,     # (Dp, W_pad)     bf16 VMEM   patch-embed weight
    vis_b1_ref,     # (1, W_pad)      f32  VMEM   patch-embed bias
    vis_proj_ref,   # (W_pad, E_pad)  bf16 VMEM   visual projection
    pool_img_ref,   # (B_pad, B*P)    bf16 VMEM   binary patch-pooling matrix
    tok_emb_ref,    # (B*S, Wt_pad)   bf16 VMEM   gathered token embeddings
    pool_txt_ref,   # (B_pad, B*S)    bf16 VMEM   binary context-pooling matrix
    txt_proj_ref,   # (Wt_pad, E_pad) bf16 VMEM   text projection
    vrow_ref,       # (B_pad, 1)      f32  VMEM   1.0 for valid batch rows else 0.0
    vcol_ref,       # (1, B_pad)      f32  VMEM   1.0 for valid batch cols else 0.0
    loss_ref,       # (1, 1)          f32  SMEM   scalar loss out
    *, inv_p, inv_s, inv_2b,
):
    f32 = jnp.float32
    bf16 = jnp.bfloat16

    # ------------------------------ image tower ------------------------------
    # Patch embed: one lane-dense 2-D MXU matmul, bf16 operands, f32 accumulation.
    h = jnp.dot(patches_ref[...], vis_w1_ref[...],
                preferred_element_type=f32)                     # (B*P, W_pad) f32
    h = jax.nn.gelu(h + vis_b1_ref[...])                        # f32 elementwise

    # Mean-pool over patches as an MXU contraction against a precomputed binary
    # block-diagonal pooling matrix; 1/P applied in f32 (exact for any P).
    pooled_img = inv_p * jnp.dot(pool_img_ref[...], h.astype(bf16),
                                 preferred_element_type=f32)    # (B_pad, W_pad) f32
    img_feat = jnp.dot(pooled_img.astype(bf16), vis_proj_ref[...],
                       preferred_element_type=f32)              # (B_pad, E_pad) f32

    # ------------------------------- text tower ------------------------------
    # Token embeddings were gathered outside the kernel; mean-pool over the context
    # with the precomputed binary pooling matrix, 1/S applied in f32.
    pooled_txt = inv_s * jnp.dot(pool_txt_ref[...], tok_emb_ref[...],
                                 preferred_element_type=f32)    # (B_pad, Wt_pad) f32
    pooled_txt = jax.nn.gelu(pooled_txt)
    txt_feat = jnp.dot(pooled_txt.astype(bf16), txt_proj_ref[...],
                       preferred_element_type=f32)              # (B_pad, E_pad) f32

    # ---------------------------- contrastive loss ---------------------------
    eps = f32(1e-12)
    txt_n = txt_feat * jax.lax.rsqrt(
        jnp.sum(txt_feat * txt_feat, axis=-1, keepdims=True) + eps)
    img_n = img_feat * jax.lax.rsqrt(
        jnp.sum(img_feat * img_feat, axis=-1, keepdims=True) + eps)

    scale = scale_ref[0, 0]
    # logits_per_text: contract the embedding dims directly (no materialized transpose).
    logits = scale * jax.lax.dot_general(
        txt_n, img_n, dimension_numbers=(((1,), (1,)), ((), ())),
        preferred_element_type=f32,
    )                                                           # (B_pad, B_pad)

    vrow = vrow_ref[...]                                        # (B_pad, 1)  0/1
    vcol = vcol_ref[...]                                        # (1, B_pad)  0/1
    neg = f32(1e30)

    # text -> image CE: row-wise LSE over the valid image columns only.
    lm_c = logits + (vcol - f32(1.0)) * neg                     # invalid cols -> -1e30
    m_row = jnp.max(lm_c, axis=1, keepdims=True)                # (B_pad, 1)
    lse_row = m_row + jnp.log(jnp.sum(jnp.exp(lm_c - m_row), axis=1, keepdims=True))

    # image -> text CE: column-wise LSE over the valid text rows (no (B,B) transpose).
    lm_r = logits + (vrow - f32(1.0)) * neg                     # invalid rows -> -1e30
    m_col = jnp.max(lm_r, axis=0, keepdims=True)                # (1, B_pad)
    lse_col = m_col + jnp.log(jnp.sum(jnp.exp(lm_r - m_col), axis=0, keepdims=True))

    # Matching-pair logits = diag(logits), computed without a (B,B) mask reduce.
    diag = scale * jnp.sum(txt_n * img_n, axis=-1, keepdims=True)   # (B_pad, 1)

    total = (jnp.sum(vrow * lse_row) + jnp.sum(vcol * lse_col)
             - f32(2.0) * jnp.sum(vrow * diag))
    loss_ref[0, 0] = total * f32(inv_2b)


# ------------------------------- wrappers -------------------------------------


def _clip_fused_call(scale, patches, vis_w1, vis_b1, vis_proj, pool_img,
                     tok_emb, pool_txt, txt_proj, vrow, vcol,
                     *, inv_p, inv_s, inv_2b):
    kernel = functools.partial(_clip_fused_kernel,
                               inv_p=inv_p, inv_s=inv_s, inv_2b=inv_2b)

    bp, dp = patches.shape
    w_pad = vis_w1.shape[1]
    b_pad = pool_img.shape[0]
    bs, wt_pad = tok_emb.shape
    e_pad = vis_proj.shape[1]

    flops = 2 * (bp * dp * w_pad            # patch embed
                 + b_pad * bp * w_pad       # image pool
                 + b_pad * w_pad * e_pad    # image projection
                 + b_pad * bs * wt_pad      # text pool
                 + b_pad * wt_pad * e_pad   # text projection
                 + b_pad * b_pad * e_pad)   # logits
    transcendentals = bp * w_pad + b_pad * wt_pad + 2 * b_pad * b_pad
    args = (scale, patches, vis_w1, vis_b1, vis_proj, pool_img,
            tok_emb, pool_txt, txt_proj, vrow, vcol)
    bytes_accessed = sum(int(np.prod(a.shape)) * a.dtype.itemsize for a in args) + 4

    loss = pl.pallas_call(
        kernel,
        out_shape=jax.ShapeDtypeStruct((1, 1), jnp.float32),
        in_specs=[_SMEM] + [_VMEM] * 10,
        out_specs=_SMEM,
        compiler_params=pltpu.CompilerParams(vmem_limit_bytes=32 * 1024 * 1024),
        cost_estimate=pl.CostEstimate(flops=flops,
                                      transcendentals=transcendentals,
                                      bytes_accessed=bytes_accessed),
    )(*args)
    return loss[0, 0]


def pad_clip_params(params):
    """One-time setup: cast weights to bf16 and zero-pad lane dims to 128-multiples."""
    def pad2(x, rows, cols, dtype):
        x = jnp.asarray(x, dtype)
        return jnp.pad(x, ((0, rows - x.shape[0]), (0, cols - x.shape[1])))

    dp, wv = params["vis_w1"].shape
    v, wt = params["tok_embedding"].shape
    e = params["vis_proj"].shape[1]
    wv_p, wt_p, e_p = (_round_up(d, 128) for d in (wv, wt, e))
    return {
        # K dims (Dp rows, vocab rows) stay unpadded: MXU pads K / gather uses real ids.
        "vis_w1": pad2(params["vis_w1"], dp, wv_p, jnp.bfloat16),
        "vis_b1": pad2(params["vis_b1"], 1, wv_p, jnp.float32),
        "vis_proj": pad2(params["vis_proj"], wv_p, e_p, jnp.bfloat16),
        "tok_embedding": pad2(params["tok_embedding"], v, wt_p, jnp.bfloat16),
        "txt_proj": pad2(params["txt_proj"], wt_p, e_p, jnp.bfloat16),
        "log_logit_scale": jnp.asarray(params["log_logit_scale"], jnp.float32),
    }


def patchify(image, patch_size):
    # image: NCHW (B, C, H, W)  ->  (B, num_patches, C*ps*ps)
    b, c, h, w = image.shape
    ps = patch_size
    x = image.reshape(b, c, h // ps, ps, w // ps, ps)
    x = x.transpose(0, 2, 4, 1, 3, 5)            # (B, H/ps, W/ps, C, ps, ps)
    return x.reshape(b, (h // ps) * (w // ps), c * ps * ps)


@functools.partial(jax.jit, static_argnames=("patch_size",))
def clip_wrapper_forward(text_tokens, image, padded_params, patch_size):
    """Equivalent of CLIPWrapper.forward(text, image) -> scalar contrastive loss."""
    b = image.shape[0]
    b_pad = _round_up(max(b, 8), 8)

    # ---- image tower input: bf16 patchify (XLA glue), flatten — no padding copies ----
    patches = patchify(image.astype(jnp.bfloat16), patch_size)     # (B, P, Dp) bf16
    p_cnt, dp = patches.shape[1], patches.shape[2]
    patches_flat = patches.reshape(b * p_cnt, dp)                   # (B*P, Dp)

    # ---- text tower input: real embedding gather (toy vocab -> wrapper-side XLA take) ----
    s = text_tokens.shape[1]
    tok_flat = text_tokens.reshape(b * s).astype(jnp.int32)
    tok_emb = jnp.take(padded_params["tok_embedding"], tok_flat, axis=0)  # (B*S, Wt_pad) bf16

    # ---- compile-time constants: pooling matrices & batch-validity masks (numpy) ----
    pool_img = np.zeros((b_pad, b * p_cnt), np.float32)
    pool_txt = np.zeros((b_pad, b * s), np.float32)
    for r in range(b):
        pool_img[r, r * p_cnt:(r + 1) * p_cnt] = 1.0
        pool_txt[r, r * s:(r + 1) * s] = 1.0
    vrow = np.zeros((b_pad, 1), np.float32)
    vrow[:b, 0] = 1.0
    vcol = vrow.reshape(1, b_pad).copy()

    scale = jnp.exp(padded_params["log_logit_scale"]).reshape(1, 1).astype(jnp.float32)

    return _clip_fused_call(
        scale, patches_flat,
        padded_params["vis_w1"], padded_params["vis_b1"], padded_params["vis_proj"],
        jnp.asarray(pool_img, jnp.bfloat16),
        tok_emb,
        jnp.asarray(pool_txt, jnp.bfloat16),
        padded_params["txt_proj"],
        jnp.asarray(vrow), jnp.asarray(vcol),
        inv_p=1.0 / p_cnt, inv_s=1.0 / s, inv_2b=1.0 / (2.0 * b))


# ------------------------------- main ------------------------------------------

if __name__ == "__main__":
    # Small, CLIP-consistent shapes.
    B = 4            # batch
    C, H, W = 3, 32, 32
    PS = 8           # patch size -> 16 patches of dim 192
    VIS_WIDTH = 64
    EMBED = 32
    VOCAB = 64
    CTX = 8
    TXT_WIDTH = 48

    key = jax.random.PRNGKey(0)
    k_img, k_txt, k1, k2, k3, k4 = jax.random.split(key, 6)

    image = jax.random.normal(k_img, (B, C, H, W), jnp.float32)          # NCHW
    text = jax.random.randint(k_txt, (B, CTX), 0, VOCAB, jnp.int32)

    patch_dim = C * PS * PS
    params = {
        "vis_w1": 0.02 * jax.random.normal(k1, (patch_dim, VIS_WIDTH), jnp.float32),
        "vis_b1": jnp.zeros((1, VIS_WIDTH), jnp.float32),
        "vis_proj": 0.02 * jax.random.normal(k2, (VIS_WIDTH, EMBED), jnp.float32),
        "tok_embedding": 0.02 * jax.random.normal(k3, (VOCAB, TXT_WIDTH), jnp.float32),
        "txt_proj": 0.02 * jax.random.normal(k4, (TXT_WIDTH, EMBED), jnp.float32),
        "log_logit_scale": jnp.asarray(jnp.log(1.0 / 0.07), jnp.float32),
    }
    padded_params = pad_clip_params(params)   # one-time, outside the hot path

    loss = clip_wrapper_forward(text, image, padded_params, patch_size=PS)
    loss = jax.block_until_ready(loss)
    assert jnp.isfinite(loss), "loss is not finite"
    print("KERNEL_OK")
</pallas_src>

<mosaic_0001>
module attributes {stable_mosaic.version = 11 : i64} {
  func.func @_clip_fused_kernel(%arg0: memref<1x1xf32, #tpu.memory_space<smem>>, %arg1: memref<64x192xbf16, #tpu.memory_space<vmem>>, %arg2: memref<192x128xbf16, #tpu.memory_space<vmem>>, %arg3: memref<1x128xf32, #tpu.memory_space<vmem>>, %arg4: memref<128x128xbf16, #tpu.memory_space<vmem>>, %arg5: memref<8x64xbf16, #tpu.memory_space<vmem>>, %arg6: memref<32x128xbf16, #tpu.memory_space<vmem>>, %arg7: memref<8x32xbf16, #tpu.memory_space<vmem>>, %arg8: memref<128x128xbf16, #tpu.memory_space<vmem>>, %arg9: memref<8x1xf32, #tpu.memory_space<vmem>>, %arg10: memref<1x8xf32, #tpu.memory_space<vmem>>, %arg11: memref<1x1xf32, #tpu.memory_space<smem>>) attributes {dimension_semantics = [], scalar_prefetch = 0 : i64, scratch_operands = 0 : i64, tpu.core_type = #tpu.core_type<tc>} {
    %c0 = arith.constant 0 : index
    %c0_0 = arith.constant 0 : index
    %0 = vector.load %arg1[%c0, %c0_0] : memref<64x192xbf16, #tpu.memory_space<vmem>>, vector<64x192xbf16>
    %c0_1 = arith.constant 0 : index
    %c0_2 = arith.constant 0 : index
    %1 = vector.load %arg2[%c0_1, %c0_2] : memref<192x128xbf16, #tpu.memory_space<vmem>>, vector<192x128xbf16>
    %cst = arith.constant dense<0.000000e+00> : vector<64x128xf32>
    %2 = tpu.matmul %0, %1, %cst {dimension_numbers = #tpu.dot_dimension_numbers<[1], [0], [0], [1], [0, 0, 1, 1], [], []>} : vector<64x192xbf16>, vector<192x128xbf16>, vector<64x128xf32> -> vector<64x128xf32>
    %c0_3 = arith.constant 0 : index
    %c0_4 = arith.constant 0 : index
    %3 = vector.load %arg3[%c0_3, %c0_4] : memref<1x128xf32, #tpu.memory_space<vmem>>, vector<1x128xf32>
    %4 = vector.broadcast %3 : vector<1x128xf32> to vector<64x128xf32>
    %5 = arith.addf %2, %4 : vector<64x128xf32>
    %6 = arith.mulf %5, %5 : vector<64x128xf32>
    %7 = arith.mulf %5, %6 : vector<64x128xf32>
    %cst_5 = arith.constant 4.471500e-02 : f32
    %8 = vector.broadcast %cst_5 : f32 to vector<64x128xf32>
    %9 = arith.mulf %8, %7 : vector<64x128xf32>
    %10 = arith.addf %5, %9 : vector<64x128xf32>
    %cst_6 = arith.constant 0.797884583 : f32
    %11 = vector.broadcast %cst_6 : f32 to vector<64x128xf32>
    %12 = arith.mulf %11, %10 : vector<64x128xf32>
    %13 = math.tanh %12 : vector<64x128xf32>
    %cst_7 = arith.constant 1.000000e+00 : f32
    %14 = vector.broadcast %cst_7 : f32 to vector<64x128xf32>
    %15 = arith.addf %14, %13 : vector<64x128xf32>
    %cst_8 = arith.constant 5.000000e-01 : f32
    %16 = vector.broadcast %cst_8 : f32 to vector<64x128xf32>
    %17 = arith.mulf %16, %15 : vector<64x128xf32>
    %18 = arith.mulf %5, %17 : vector<64x128xf32>
    %c0_9 = arith.constant 0 : index
    %c0_10 = arith.constant 0 : index
    %19 = vector.load %arg5[%c0_9, %c0_10] : memref<8x64xbf16, #tpu.memory_space<vmem>>, vector<8x64xbf16>
    %20 = arith.truncf %18 : vector<64x128xf32> to vector<64x128xbf16>
    %cst_11 = arith.constant dense<0.000000e+00> : vector<8x128xf32>
    %21 = tpu.matmul %19, %20, %cst_11 {dimension_numbers = #tpu.dot_dimension_numbers<[1], [0], [0], [1], [0, 0, 1, 1], [], []>} : vector<8x64xbf16>, vector<64x128xbf16>, vector<8x128xf32> -> vector<8x128xf32>
    %cst_12 = arith.constant 6.250000e-02 : f32
    %22 = vector.broadcast %cst_12 : f32 to vector<8x128xf32>
    %23 = arith.mulf %22, %21 : vector<8x128xf32>
    %24 = arith.truncf %23 : vector<8x128xf32> to vector<8x128xbf16>
    %c0_13 = arith.constant 0 : index
    %c0_14 = arith.constant 0 : index
    %25 = vector.load %arg4[%c0_13, %c0_14] : memref<128x128xbf16, #tpu.memory_space<vmem>>, vector<128x128xbf16>
    %cst_15 = arith.constant dense<0.000000e+00> : vector<8x128xf32>
    %26 = tpu.matmul %24, %25, %cst_15 {dimension_numbers = #tpu.dot_dimension_numbers<[1], [0], [0], [1], [0, 0, 1, 1], [], []>} : vector<8x128xbf16>, vector<128x128xbf16>, vector<8x128xf32> -> vector<8x128xf32>
    %c0_16 = arith.constant 0 : index
    %c0_17 = arith.constant 0 : index
    %27 = vector.load %arg7[%c0_16, %c0_17] : memref<8x32xbf16, #tpu.memory_space<vmem>>, vector<8x32xbf16>
    %c0_18 = arith.constant 0 : index
    %c0_19 = arith.constant 0 : index
    %28 = vector.load %arg6[%c0_18, %c0_19] : memref<32x128xbf16, #tpu.memory_space<vmem>>, vector<32x128xbf16>
    %cst_20 = arith.constant dense<0.000000e+00> : vector<8x128xf32>
    %29 = tpu.matmul %27, %28, %cst_20 {dimension_numbers = #tpu.dot_dimension_numbers<[1], [0], [0], [1], [0, 0, 1, 1], [], []>} : vector<8x32xbf16>, vector<32x128xbf16>, vector<8x128xf32> -> vector<8x128xf32>
    %cst_21 = arith.constant 1.250000e-01 : f32
    %30 = vector.broadcast %cst_21 : f32 to vector<8x128xf32>
    %31 = arith.mulf %30, %29 : vector<8x128xf32>
    %32 = arith.mulf %31, %31 : vector<8x128xf32>
    %33 = arith.mulf %31, %32 : vector<8x128xf32>
    %cst_22 = arith.constant 4.471500e-02 : f32
    %34 = vector.broadcast %cst_22 : f32 to vector<8x128xf32>
    %35 = arith.mulf %34, %33 : vector<8x128xf32>
    %36 = arith.addf %31, %35 : vector<8x128xf32>
    %cst_23 = arith.constant 0.797884583 : f32
    %37 = vector.broadcast %cst_23 : f32 to vector<8x128xf32>
    %38 = arith.mulf %37, %36 : vector<8x128xf32>
    %39 = math.tanh %38 : vector<8x128xf32>
    %cst_24 = arith.constant 1.000000e+00 : f32
    %40 = vector.broadcast %cst_24 : f32 to vector<8x128xf32>
    %41 = arith.addf %40, %39 : vector<8x128xf32>
    %cst_25 = arith.constant 5.000000e-01 : f32
    %42 = vector.broadcast %cst_25 : f32 to vector<8x128xf32>
    %43 = arith.mulf %42, %41 : vector<8x128xf32>
    %44 = arith.mulf %31, %43 : vector<8x128xf32>
    %45 = arith.truncf %44 : vector<8x128xf32> to vector<8x128xbf16>
    %c0_26 = arith.constant 0 : index
    %c0_27 = arith.constant 0 : index
    %46 = vector.load %arg8[%c0_26, %c0_27] : memref<128x128xbf16, #tpu.memory_space<vmem>>, vector<128x128xbf16>
    %cst_28 = arith.constant dense<0.000000e+00> : vector<8x128xf32>
    %47 = tpu.matmul %45, %46, %cst_28 {dimension_numbers = #tpu.dot_dimension_numbers<[1], [0], [0], [1], [0, 0, 1, 1], [], []>} : vector<8x128xbf16>, vector<128x128xbf16>, vector<8x128xf32> -> vector<8x128xf32>
    %48 = arith.mulf %47, %47 : vector<8x128xf32>
    %cst_29 = arith.constant dense<0.000000e+00> : vector<8xf32>
    %49 = vector.multi_reduction <add>, %48, %cst_29 [1] : vector<8x128xf32> to vector<8xf32>
    %50 = vector.shape_cast %49 : vector<8xf32> to vector<8x1xf32>
    %cst_30 = arith.constant 9.99999996E-13 : f32
    %51 = vector.broadcast %cst_30 : f32 to vector<8x1xf32>
    %52 = arith.addf %50, %51 : vector<8x1xf32>
    %53 = math.rsqrt %52 : vector<8x1xf32>
    %54 = vector.broadcast %53 : vector<8x1xf32> to vector<8x128xf32>
    %55 = arith.mulf %47, %54 : vector<8x128xf32>
    %56 = arith.mulf %26, %26 : vector<8x128xf32>
    %cst_31 = arith.constant dense<0.000000e+00> : vector<8xf32>
    %57 = vector.multi_reduction <add>, %56, %cst_31 [1] : vector<8x128xf32> to vector<8xf32>
    %58 = vector.shape_cast %57 : vector<8xf32> to vector<8x1xf32>
    %cst_32 = arith.constant 9.99999996E-13 : f32
    %59 = vector.broadcast %cst_32 : f32 to vector<8x1xf32>
    %60 = arith.addf %58, %59 : vector<8x1xf32>
    %61 = math.rsqrt %60 : vector<8x1xf32>
    %62 = vector.broadcast %61 : vector<8x1xf32> to vector<8x128xf32>
    %63 = arith.mulf %26, %62 : vector<8x128xf32>
    %c0_33 = arith.constant 0 : index
    %c0_34 = arith.constant 0 : index
    %64 = memref.load %arg0[%c0_33, %c0_34] : memref<1x1xf32, #tpu.memory_space<smem>>
    %cst_35 = arith.constant dense<0.000000e+00> : vector<8x8xf32>
    %65 = tpu.matmul %55, %63, %cst_35 {dimension_numbers = #tpu.dot_dimension_numbers<[1], [1], [0], [0], [0, 0, 1, 0], [], []>} : vector<8x128xf32>, vector<8x128xf32>, vector<8x8xf32> -> vector<8x8xf32>
    %66 = vector.broadcast %64 : f32 to vector<8x8xf32>
    %67 = arith.mulf %66, %65 : vector<8x8xf32>
    %c0_36 = arith.constant 0 : index
    %c0_37 = arith.constant 0 : index
    %68 = vector.load %arg9[%c0_36, %c0_37] : memref<8x1xf32, #tpu.memory_space<vmem>>, vector<8x1xf32>
    %c0_38 = arith.constant 0 : index
    %c0_39 = arith.constant 0 : index
    %69 = vector.load %arg10[%c0_38, %c0_39] : memref<1x8xf32, #tpu.memory_space<vmem>>, vector<1x8xf32>
    %cst_40 = arith.constant 1.000000e+00 : f32
    %70 = vector.broadcast %cst_40 : f32 to vector<1x8xf32>
    %71 = arith.subf %69, %70 : vector<1x8xf32>
    %cst_41 = arith.constant 1.000000e+30 : f32
    %72 = vector.broadcast %cst_41 : f32 to vector<1x8xf32>
    %73 = arith.mulf %71, %72 : vector<1x8xf32>
    %74 = vector.broadcast %73 : vector<1x8xf32> to vector<8x8xf32>
    %75 = arith.addf %67, %74 : vector<8x8xf32>
    %cst_42 = arith.constant dense<0xFF800000> : vector<8xf32>
    %76 = vector.multi_reduction <maximumf>, %75, %cst_42 [1] : vector<8x8xf32> to vector<8xf32>
    %77 = vector.shape_cast %76 : vector<8xf32> to vector<8x1xf32>
    %78 = vector.broadcast %77 : vector<8x1xf32> to vector<8x8xf32>
    %79 = arith.subf %75, %78 : vector<8x8xf32>
    %80 = math.exp %79 : vector<8x8xf32>
    %cst_43 = arith.constant dense<0.000000e+00> : vector<8xf32>
    %81 = vector.multi_reduction <add>, %80, %cst_43 [1] : vector<8x8xf32> to vector<8xf32>
    %82 = vector.shape_cast %81 : vector<8xf32> to vector<8x1xf32>
    %83 = math.log %82 : vector<8x1xf32>
    %84 = arith.addf %77, %83 : vector<8x1xf32>
    %cst_44 = arith.constant 1.000000e+00 : f32
    %85 = vector.broadcast %cst_44 : f32 to vector<8x1xf32>
    %86 = arith.subf %68, %85 : vector<8x1xf32>
    %cst_45 = arith.constant 1.000000e+30 : f32
    %87 = vector.broadcast %cst_45 : f32 to vector<8x1xf32>
    %88 = arith.mulf %86, %87 : vector<8x1xf32>
    %89 = vector.broadcast %88 : vector<8x1xf32> to vector<8x8xf32>
    %90 = arith.addf %67, %89 : vector<8x8xf32>
    %cst_46 = arith.constant dense<0xFF800000> : vector<8xf32>
    %91 = vector.multi_reduction <maximumf>, %90, %cst_46 [0] : vector<8x8xf32> to vector<8xf32>
    %92 = vector.shape_cast %91 : vector<8xf32> to vector<1x8xf32>
    %93 = vector.broadcast %92 : vector<1x8xf32> to vector<8x8xf32>
    %94 = arith.subf %90, %93 : vector<8x8xf32>
    %95 = math.exp %94 : vector<8x8xf32>
    %cst_47 = arith.constant dense<0.000000e+00> : vector<8xf32>
    %96 = vector.multi_reduction <add>, %95, %cst_47 [0] : vector<8x8xf32> to vector<8xf32>
    %97 = vector.shape_cast %96 : vector<8xf32> to vector<1x8xf32>
    %98 = math.log %97 : vector<1x8xf32>
    %99 = arith.addf %92, %98 : vector<1x8xf32>
    %100 = arith.mulf %55, %63 : vector<8x128xf32>
    %cst_48 = arith.constant dense<0.000000e+00> : vector<8xf32>
    %101 = vector.multi_reduction <add>, %100, %cst_48 [1] : vector<8x128xf32> to vector<8xf32>
    %102 = vector.shape_cast %101 : vector<8xf32> to vector<8x1xf32>
    %103 = vector.broadcast %64 : f32 to vector<8x1xf32>
    %104 = arith.mulf %103, %102 : vector<8x1xf32>
    %105 = arith.mulf %68, %84 : vector<8x1xf32>
    %106 = vector.shape_cast %105 : vector<8x1xf32> to vector<1x8x1xf32>
    %cst_49 = arith.constant dense<0.000000e+00> : vector<1xf32>
    %107 = vector.multi_reduction <add>, %106, %cst_49 [1, 2] : vector<1x8x1xf32> to vector<1xf32>
    %108 = vector.shape_cast %107 : vector<1xf32> to vector<1x1x1xf32>
    %109 = vector.extract %108[0, 0, 0] : f32 from vector<1x1x1xf32>
    %110 = arith.mulf %69, %99 : vector<1x8xf32>
    %111 = vector.shape_cast %110 : vector<1x8xf32> to vector<1x1x8xf32>
    %cst_50 = arith.constant dense<0.000000e+00> : vector<1xf32>
    %112 = vector.multi_reduction <add>, %111, %cst_50 [1, 2] : vector<1x1x8xf32> to vector<1xf32>
    %113 = vector.shape_cast %112 : vector<1xf32> to vector<1x1x1xf32>
    %114 = vector.extract %113[0, 0, 0] : f32 from vector<1x1x1xf32>
    %115 = arith.addf %109, %114 : f32
    %116 = arith.mulf %68, %104 : vector<8x1xf32>
    %117 = vector.shape_cast %116 : vector<8x1xf32> to vector<1x8x1xf32>
    %cst_51 = arith.constant dense<0.000000e+00> : vector<1xf32>
    %118 = vector.multi_reduction <add>, %117, %cst_51 [1, 2] : vector<1x8x1xf32> to vector<1xf32>
    %119 = vector.shape_cast %118 : vector<1xf32> to vector<1x1x1xf32>
    %120 = vector.extract %119[0, 0, 0] : f32 from vector<1x1x1xf32>
    %cst_52 = arith.constant 2.000000e+00 : f32
    %121 = arith.mulf %cst_52, %120 : f32
    %122 = arith.subf %115, %121 : f32
    %cst_53 = arith.constant 1.250000e-01 : f32
    %123 = arith.mulf %122, %cst_53 : f32
    %c0_54 = arith.constant 0 : index
    %c0_55 = arith.constant 0 : index
    %124 = memref.load %arg11[%c0_54, %c0_55] : memref<1x1xf32, #tpu.memory_space<smem>>
    memref.store %123, %arg11[%c0_54, %c0_55] : memref<1x1xf32, #tpu.memory_space<smem>>
    return
  }
}

</mosaic_0001>

<llo_original>
// kernel: clip_wrapper_forward.1
$region0: #{clip_wrapper_forward.1}
  #allocation0 [shape = 'u32[]', space=smem, size = 0x4, offset = 0x4, fixed_abs, tag = 'smem constant byte address 0x4 - core index']
  #allocation1 [shape = 'u32[72,128]{1,0:T(1,128)}', space=vmem, size = 0x9000, scoped, tag = 'internal scratch']
  #allocation2 [shape = 'f32[1,1]{1,0:T(1,128)S(6)}', space=smem, size = 0x200, scoped, tag = 'scoped memory for clip_wrapper_forward.1']
  %s0 = inlined_call_operand.<no memory space> [shape: f32[1,1], index: 0, kind: input, shape index: {}]
  %s1 = inlined_call_operand.vmem [shape: bf16[64,192], index: 1, kind: input, shape index: {}]
  %s2 = inlined_call_operand.vmem [shape: bf16[192,128], index: 2, kind: input, shape index: {}]
  %s3 = inlined_call_operand.vmem [shape: f32[1,128], index: 3, kind: input, shape index: {}]
  %s4 = inlined_call_operand.vmem [shape: bf16[128,128], index: 4, kind: input, shape index: {}]
  %s5 = inlined_call_operand.vmem [shape: bf16[8,64], index: 5, kind: input, shape index: {}]
  %s6 = inlined_call_operand.vmem [shape: bf16[32,128], index: 6, kind: input, shape index: {}]
  %s7 = inlined_call_operand.vmem [shape: bf16[8,32], index: 7, kind: input, shape index: {}]
  %s8 = inlined_call_operand.vmem [shape: bf16[128,128], index: 8, kind: input, shape index: {}]
  %s9 = inlined_call_operand.vmem [shape: f32[8,1], index: 9, kind: input, shape index: {}]
  %s10 = inlined_call_operand.vmem [shape: f32[1,8], index: 10, kind: input, shape index: {}]
  %s11 = inlined_call_operand.hbm [shape: f32[1,1], index: 11, kind: output, shape index: {}]
  %s12 = sld [smem:[#allocation0]]
  $region54: #{clip_wrapper_forward.1} parent=0
    _
  %s14 = ssub.s32 1, %s12
  %s15 = scalar_select 0, %s14, %s12
  %16 = sst [smem:[#allocation2]] %s0
  $region1: #{clip_wrapper_forward.1} parent=0
    #allocation3 [shape = 'u8[512]{0}', space=smem, size = 0x200, scoped, tag = 'output window, operand 0, single buffered']
    #allocation4 [shape = 's32[1]{0}', space=sflag, size = 0x4, scoped, tag = 'scoped memory for clip_wrapper_forward.1']
    %17 = vsyncpa [#allocation4], 0
    // Predicated region
    $region2: #{clip_wrapper_forward.1} parent=1 // pred_check
      _
    $region3: #{clip_wrapper_forward.1} parent=1 // pred_check_branch
      %19 = sbr.rel (0) target = $region5
    $region4: #{clip_wrapper_forward.1} parent=1 // pred_region
      _
    $region5: #{clip_wrapper_forward.1} parent=1 // pred_fallthru
      _
    // Predicated region
    $region6: #{clip_wrapper_forward.1} parent=1 // pred_check
      _
    $region7: #{clip_wrapper_forward.1} parent=1 // pred_check_branch
      %21 = sbr.rel (0) target = $region9
    $region8: #{clip_wrapper_forward.1} parent=1 // pred_region
      _
    $region9: #{clip_wrapper_forward.1} parent=1 // pred_fallthru
      _
    // Predicated region
    $region10: #{clip_wrapper_forward.1} parent=1 // pred_check
      _
    $region11: #{clip_wrapper_forward.1} parent=1 // pred_check_branch
      %23 = sbr.rel (0) target = $region13
    $region12: #{clip_wrapper_forward.1} parent=1 // pred_region
      _
    $region13: #{clip_wrapper_forward.1} parent=1 // pred_fallthru
      _
    // Predicated region
    $region14: #{clip_wrapper_forward.1} parent=1 // pred_check
      _
    $region15: #{clip_wrapper_forward.1} parent=1 // pred_check_branch
      %25 = sbr.rel (0) target = $region17
    $region16: #{clip_wrapper_forward.1} parent=1 // pred_region
      _
    $region17: #{clip_wrapper_forward.1} parent=1 // pred_fallthru
      _
    // Predicated region
    $region18: #{clip_wrapper_forward.1} parent=1 // pred_check
      _
    $region19: #{clip_wrapper_forward.1} parent=1 // pred_check_branch
      %27 = sbr.rel (0) target = $region21
    $region20: #{clip_wrapper_forward.1} parent=1 // pred_region
      _
    $region21: #{clip_wrapper_forward.1} parent=1 // pred_fallthru
      _
    // Predicated region
    $region22: #{clip_wrapper_forward.1} parent=1 // pred_check
      _
    $region23: #{clip_wrapper_forward.1} parent=1 // pred_check_branch
      %29 = sbr.rel (0) target = $region25
    $region24: #{clip_wrapper_forward.1} parent=1 // pred_region
      _
    $region25: #{clip_wrapper_forward.1} parent=1 // pred_fallthru
      _
    // Predicated region
    $region26: #{clip_wrapper_forward.1} parent=1 // pred_check
      _
    $region27: #{clip_wrapper_forward.1} parent=1 // pred_check_branch
      %31 = sbr.rel (0) target = $region29
    $region28: #{clip_wrapper_forward.1} parent=1 // pred_region
      _
    $region29: #{clip_wrapper_forward.1} parent=1 // pred_fallthru
      _
    // Predicated region
    $region30: #{clip_wrapper_forward.1} parent=1 // pred_check
      _
    $region31: #{clip_wrapper_forward.1} parent=1 // pred_check_branch
      %33 = sbr.rel (0) target = $region33
    $region32: #{clip_wrapper_forward.1} parent=1 // pred_region
      _
    $region33: #{clip_wrapper_forward.1} parent=1 // pred_fallthru
      _
    // Predicated region
    $region34: #{clip_wrapper_forward.1} parent=1 // pred_check
      _
    $region35: #{clip_wrapper_forward.1} parent=1 // pred_check_branch
      %35 = sbr.rel (0) target = $region37
    $region36: #{clip_wrapper_forward.1} parent=1 // pred_region
      _
    $region37: #{clip_wrapper_forward.1} parent=1 // pred_fallthru
      _
    // Predicated region
    $region38: #{clip_wrapper_forward.1} parent=1 // pred_check
      _
    $region39: #{clip_wrapper_forward.1} parent=1 // pred_check_branch
      %37 = sbr.rel (0) target = $region41
    $region40: #{clip_wrapper_forward.1} parent=1 // pred_region
      _
    $region41: #{clip_wrapper_forward.1} parent=1 // pred_fallthru
      _
    // Predicated region
    $region42: #{clip_wrapper_forward.1} parent=1 // pred_check
      _
    $region43: #{clip_wrapper_forward.1} parent=1 // pred_check_branch
      %39 = sbr.rel (0) target = $region45
    $region44: #{clip_wrapper_forward.1} parent=1 // pred_region
      _
    $region45: #{clip_wrapper_forward.1} parent=1 // pred_fallthru
      _
    %v41 = vld [vmem:[%s1] sm:$0xff]
    %v42 = vld [vmem:[%s1 + $0x8] sm:$0xff]
    %v43 = vld [vmem:[%s1 + $0x10] sm:$0xff]
    %v44 = vld [vmem:[%s1 + $0x18] sm:$0xff]
    %v45 = vld [vmem:[%s1 + $0x20] sm:$0xff]
    %v46 = vld [vmem:[%s1 + $0x28] sm:$0xff]
    %v47 = vld [vmem:[%s1 + $0x30] sm:$0xff]
    %v48 = vld [vmem:[%s1 + $0x38] sm:$0xff]
    %v49 = vld [vmem:[%s2] sm:$0xf]
    %v50 = vld [vmem:[%s2 + $0x4] sm:$0xf]
    %v51 = vld [vmem:[%s2 + $0x8] sm:$0xf]
    %v52 = vld [vmem:[%s2 + $0xc] sm:$0xf]
    %v53 = vld [vmem:[%s2 + $0x10] sm:$0xf]
    %v54 = vld [vmem:[%s2 + $0x14] sm:$0xf]
    %v55 = vld [vmem:[%s2 + $0x18] sm:$0xf]
    %v56 = vld [vmem:[%s2 + $0x1c] sm:$0xf]
    %v57 = vld [vmem:[%s2 + $0x20] sm:$0xf]
    %v58 = vld [vmem:[%s2 + $0x24] sm:$0xf]
    %v59 = vld [vmem:[%s2 + $0x28] sm:$0xf]
    %v60 = vld [vmem:[%s2 + $0x2c] sm:$0xf]
    %v61 = vld [vmem:[%s2 + $0x30] sm:$0xf]
    %v62 = vld [vmem:[%s2 + $0x34] sm:$0xf]
    %v63 = vld [vmem:[%s2 + $0x38] sm:$0xf]
    %v64 = vld [vmem:[%s2 + $0x3c] sm:$0xf]
    %v65 = vld [vmem:[%s2 + $0x40] sm:$0xf]
    %v66 = vld [vmem:[%s2 + $0x44] sm:$0xf]
    %v67 = vld [vmem:[%s2 + $0x48] sm:$0xf]
    %v68 = vld [vmem:[%s2 + $0x4c] sm:$0xf]
    %v69 = vld [vmem:[%s2 + $0x50] sm:$0xf]
    %v70 = vld [vmem:[%s2 + $0x54] sm:$0xf]
    %v71 = vld [vmem:[%s2 + $0x58] sm:$0xf]
    %v72 = vld [vmem:[%s2 + $0x5c] sm:$0xf]
    %v73 = vld [vmem:[%s3] sm:$0x1]
    %v75 = vperm.slane %v73, 0
    %v85 = vunpack.c.l.b16 %v41
    %v86 = vunpack.c.h.b16 %v41
    %v87 = vunpack.c.l.b16 %v42
    %v88 = vunpack.c.h.b16 %v42
    %v89 = vunpack.c.l.b16 %v43
    %v90 = vunpack.c.h.b16 %v43
    %v91 = vunpack.c.l.b16 %v44
    %v92 = vunpack.c.h.b16 %v44
    %v93 = vunpack.c.l.b16 %v45
    %v94 = vunpack.c.h.b16 %v45
    %v95 = vunpack.c.l.b16 %v46
    %v96 = vunpack.c.h.b16 %v46
    %v97 = vunpack.c.l.b16 %v47
    %v98 = vunpack.c.h.b16 %v47
    %v99 = vunpack.c.l.b16 %v48
    %v100 = vunpack.c.h.b16 %v48
    %v101 = vpack.c.b16 %v87, %v85
    %v102 = vpack.c.b16 %v88, %v86
    %v103 = vpack.c.b16 %v91, %v89
    %v104 = vpack.c.b16 %v92, %v90
    %v105 = vpack.c.b16 %v95, %v93
    %v106 = vpack.c.b16 %v96, %v94
    %v107 = vpack.c.b16 %v99, %v97
    %v108 = vpack.c.b16 %v100, %v98
    %v137 = vunpack.c.l.b16 %v49
    %v138 = vunpack.c.l.b16 %v50
    %v139 = vunpack.c.l.b16 %v51
    %v140 = vunpack.c.l.b16 %v52
    %v141 = vunpack.c.l.b16 %v53
    %v142 = vunpack.c.l.b16 %v54
    %v143 = vunpack.c.l.b16 %v55
    %v144 = vunpack.c.l.b16 %v56
    %v145 = vunpack.c.l.b16 %v57
    %v146 = vunpack.c.l.b16 %v58
    %v147 = vunpack.c.l.b16 %v59
    %v148 = vunpack.c.l.b16 %v60
    %v149 = vunpack.c.l.b16 %v61
    %v150 = vunpack.c.l.b16 %v62
    %v151 = vunpack.c.l.b16 %v63
    %v152 = vunpack.c.l.b16 %v64
    %v153 = vunpack.c.l.b16 %v65
    %v154 = vunpack.c.l.b16 %v66
    %v155 = vunpack.c.l.b16 %v67
    %v156 = vunpack.c.l.b16 %v68
    %v157 = vunpack.c.l.b16 %v69
    %v158 = vunpack.c.l.b16 %v70
    %v159 = vunpack.c.l.b16 %v71
    %v160 = vunpack.c.l.b16 %v72
    %v161 = vpack.c.b16 %v138, %v137
    %v162 = vpack.c.b16 %v140, %v139
    %v163 = vpack.c.b16 %v142, %v141
    %v164 = vpack.c.b16 %v144, %v143
    %v165 = vpack.c.b16 %v146, %v145
    %v166 = vpack.c.b16 %v148, %v147
    %v167 = vpack.c.b16 %v150, %v149
    %v168 = vpack.c.b16 %v152, %v151
    %v169 = vpack.c.b16 %v154, %v153
    %v170 = vpack.c.b16 %v156, %v155
    %v171 = vpack.c.b16 %v158, %v157
    %v172 = vpack.c.b16 %v160, %v159
    %vm185 = vcmask 523264
    %v187 = vsel %vm185, %v102, 0
    %v190 = vsel %vm185, %v104, 0
    %v193 = vsel %vm185, %v106, 0
    %v196 = vsel %vm185, %v108, 0
    %198 = vmatpush.bf16.msra.mxu0 %v168
    %199 = vmatpush.bf16.msra.mxu0 %v167
    %200 = vmatpush.bf16.msra.mxu0 %v166
    %201 = vmatpush.bf16.msra.mxu0 %v165
    %202 = vmatpush.bf16.msra.mxu0 %v164
    %203 = vmatpush.bf16.msra.mxu0 %v163
    %204 = vmatpush.bf16.msra.mxu0 %v162
    %205 = vmatpush.bf16.msra.mxu0 %v161
    %206 = vmatmul.bf16.gmra.mxu0 %v101
    %v207 = vpop.f32.mrf.mxu0
    %v208 = vadd.f32 %v75, %v207
    %v209 = vpop.f32.mrf.mxu0
    %v210 = vadd.f32 %v75, %v209
    %211 = vmatmul.bf16.gmra.mxu0 %v103
    %v212 = vpop.f32.mrf.mxu0
    %v213 = vadd.f32 %v75, %v212
    %v214 = vpop.f32.mrf.mxu0
    %v215 = vadd.f32 %v75, %v214
    %216 = vmatmul.bf16.gmra.mxu0 %v105
    %v217 = vpop.f32.mrf.mxu0
    %v218 = vadd.f32 %v75, %v217
    %v219 = vpop.f32.mrf.mxu0
    %v220 = vadd.f32 %v75, %v219
    %221 = vmatmul.bf16.gmra.mxu0 %v107
    %v222 = vpop.f32.mrf.mxu0
    %v223 = vadd.f32 %v75, %v222
    %v224 = vpop.f32.mrf.mxu0
    %v225 = vadd.f32 %v75, %v224
    %226 = vdwg.mxu0
    %227 = vmatpush.bf16.msra.mxu0 0
    %228 = vmatpush.bf16.msra.mxu0 0
    %229 = vmatpush.bf16.msra.mxu0 0
    %230 = vmatpush.bf16.msra.mxu0 0
    %231 = vmatpush.bf16.msra.mxu0 %v172
    %232 = vmatpush.bf16.msra.mxu0 %v171
    %233 = vmatpush.bf16.msra.mxu0 %v170
    %234 = vmatpush.bf16.msra.mxu0 %v169
    %235 = vmatmul.bf16.gmra.mxu0 %v187
    %v236 = vpop.f32.mrf.mxu0
    %v237 = vadd.f32 %v208, %v236
    %v238 = vpop.f32.mrf.mxu0
    %v239 = vadd.f32 %v210, %v238
    %240 = vmatmul.bf16.gmra.mxu0 %v190
    %v241 = vpop.f32.mrf.mxu0
    %v242 = vadd.f32 %v213, %v241
    %v243 = vpop.f32.mrf.mxu0
    %v244 = vadd.f32 %v215, %v243
    %245 = vmatmul.bf16.gmra.mxu0 %v193
    %v246 = vpop.f32.mrf.mxu0
    %v247 = vadd.f32 %v218, %v246
    %v248 = vpop.f32.mrf.mxu0
    %v249 = vadd.f32 %v220, %v248
    %250 = vmatmul.bf16.gmra.mxu0 %v196
    %v251 = vpop.f32.mrf.mxu0
    %v252 = vadd.f32 %v223, %v251
    %v253 = vpop.f32.mrf.mxu0
    %v254 = vadd.f32 %v225, %v253
    %255 = vdwg.mxu0
    %v256 = vmul.f32 %v237, %v237
    %v257 = vmul.f32 %v239, %v239
    %v258 = vmul.f32 %v242, %v242
    %v259 = vmul.f32 %v244, %v244
    %v260 = vmul.f32 %v247, %v247
    %v261 = vmul.f32 %v249, %v249
    %v262 = vmul.f32 %v252, %v252
    %v263 = vmul.f32 %v254, %v254
    %v264 = vmul.f32 %v237, %v256
    %v265 = vmul.f32 %v239, %v257
    %v266 = vmul.f32 %v242, %v258
    %v267 = vmul.f32 %v244, %v259
    %v268 = vmul.f32 %v247, %v260
    %v269 = vmul.f32 %v249, %v261
    %v270 = vmul.f32 %v252, %v262
    %v271 = vmul.f32 %v254, %v263
    %v272 = vmul.f32 %v264, 0.044715
    %v273 = vmul.f32 %v265, 0.044715
    %v274 = vmul.f32 %v266, 0.044715
    %v275 = vmul.f32 %v267, 0.044715
    %v276 = vmul.f32 %v268, 0.044715
    %v277 = vmul.f32 %v269, 0.044715
    %v278 = vmul.f32 %v270, 0.044715
    %v279 = vmul.f32 %v271, 0.044715
    %v280 = vadd.f32 %v237, %v272
    %v281 = vadd.f32 %v239, %v273
    %v282 = vadd.f32 %v242, %v274
    %v283 = vadd.f32 %v244, %v275
    %v284 = vadd.f32 %v247, %v276
    %v285 = vadd.f32 %v249, %v277
    %v286 = vadd.f32 %v252, %v278
    %v287 = vadd.f32 %v254, %v279
    %v288 = vmul.f32 %v280, 0.7978846
    %v289 = vmul.f32 %v281, 0.7978846
    %v290 = vmul.f32 %v282, 0.7978846
    %v291 = vmul.f32 %v283, 0.7978846
    %v292 = vmul.f32 %v284, 0.7978846
    %v293 = vmul.f32 %v285, 0.7978846
    %v294 = vmul.f32 %v286, 0.7978846
    %v295 = vmul.f32 %v287, 0.7978846
    %v296 = vtanh.pop %v288
    %v297 = vtanh.pop %v289
    %v298 = vtanh.pop %v290
    %v299 = vtanh.pop %v291
    %v300 = vtanh.pop %v292
    %v301 = vtanh.pop %v293
    %v302 = vtanh.pop %v294
    %v303 = vtanh.pop %v295
    %v304 = vadd.f32 %v296, 1.0
    %v305 = vadd.f32 %v297, 1.0
    %v306 = vadd.f32 %v298, 1.0
    %v307 = vadd.f32 %v299, 1.0
    %v308 = vadd.f32 %v300, 1.0
    %v309 = vadd.f32 %v301, 1.0
    %v310 = vadd.f32 %v302, 1.0
    %v311 = vadd.f32 %v303, 1.0
    %v312 = vmul.f32 %v304, 0.5
    %v313 = vmul.f32 %v305, 0.5
    %v314 = vmul.f32 %v306, 0.5
    %v315 = vmul.f32 %v307, 0.5
    %v316 = vmul.f32 %v308, 0.5
    %v317 = vmul.f32 %v309, 0.5
    %v318 = vmul.f32 %v310, 0.5
    %v319 = vmul.f32 %v311, 0.5
    %v320 = vmul.f32 %v237, %v312
    %v321 = vmul.f32 %v239, %v313
    %v322 = vmul.f32 %v242, %v314
    %v323 = vmul.f32 %v244, %v315
    %v324 = vmul.f32 %v247, %v316
    %v325 = vmul.f32 %v249, %v317
    %v326 = vmul.f32 %v252, %v318
    %v327 = vmul.f32 %v254, %v319
    %v328 = vld [vmem:[%s5] sm:$0xf]
    %v329 = vpack.c.bf16 %v321, %v320
    %v330 = vpack.c.bf16 %v323, %v322
    %v331 = vpack.c.bf16 %v325, %v324
    %v332 = vpack.c.bf16 %v327, %v326
    %v334 = vsel %vm185, %v328, 0
    %336 = vmatpush.bf16.msra.mxu0 0
    %337 = vmatpush.bf16.msra.mxu0 0
    %338 = vmatpush.bf16.msra.mxu0 0
    %339 = vmatpush.bf16.msra.mxu0 0
    %340 = vmatpush.bf16.msra.mxu0 %v332
    %341 = vmatpush.bf16.msra.mxu0 %v331
    %342 = vmatpush.bf16.msra.mxu0 %v330
    %343 = vmatpush.bf16.msra.mxu0 %v329
    %344 = vmatmul.bf16.gmra.mxu0 %v334
    %v345 = vpop.f32.mrf.mxu0
    %v346 = vadd.f32 0.0, %v345
    %v347 = vpop.f32.mrf.mxu0
    %348 = vdwg.mxu0
    %v349 = vmul.f32 %v346, 0.0625
    %v350 = vpack.c.bf16 %v349, %v349
    %v351 = vld [vmem:[%s4] sm:$0xf]
    %v352 = vld [vmem:[%s4 + $0x4] sm:$0xf]
    %v353 = vld [vmem:[%s4 + $0x8] sm:$0xf]
    %v354 = vld [vmem:[%s4 + $0xc] sm:$0xf]
    %v355 = vld [vmem:[%s4 + $0x10] sm:$0xf]
    %v356 = vld [vmem:[%s4 + $0x14] sm:$0xf]
    %v357 = vld [vmem:[%s4 + $0x18] sm:$0xf]
    %v358 = vld [vmem:[%s4 + $0x1c] sm:$0xf]
    %v359 = vld [vmem:[%s4 + $0x20] sm:$0xf]
    %v360 = vld [vmem:[%s4 + $0x24] sm:$0xf]
    %v361 = vld [vmem:[%s4 + $0x28] sm:$0xf]
    %v362 = vld [vmem:[%s4 + $0x2c] sm:$0xf]
    %v363 = vld [vmem:[%s4 + $0x30] sm:$0xf]
    %v364 = vld [vmem:[%s4 + $0x34] sm:$0xf]
    %v365 = vld [vmem:[%s4 + $0x38] sm:$0xf]
    %v366 = vld [vmem:[%s4 + $0x3c] sm:$0xf]
    %v383 = vunpack.c.l.b16 %v351
    %v384 = vunpack.c.l.b16 %v352
    %v385 = vunpack.c.l.b16 %v353
    %v386 = vunpack.c.l.b16 %v354
    %v387 = vunpack.c.l.b16 %v355
    %v388 = vunpack.c.l.b16 %v356
    %v389 = vunpack.c.l.b16 %v357
    %v390 = vunpack.c.l.b16 %v358
    %v391 = vunpack.c.l.b16 %v359
    %v392 = vunpack.c.l.b16 %v360
    %v393 = vunpack.c.l.b16 %v361
    %v394 = vunpack.c.l.b16 %v362
    %v395 = vunpack.c.l.b16 %v363
    %v396 = vunpack.c.l.b16 %v364
    %v397 = vunpack.c.l.b16 %v365
    %v398 = vunpack.c.l.b16 %v366
    %v399 = vpack.c.b16 %v384, %v383
    %v400 = vpack.c.b16 %v386, %v385
    %v401 = vpack.c.b16 %v388, %v387
    %v402 = vpack.c.b16 %v390, %v389
    %v403 = vpack.c.b16 %v392, %v391
    %v404 = vpack.c.b16 %v394, %v393
    %v405 = vpack.c.b16 %v396, %v395
    %v406 = vpack.c.b16 %v398, %v397
    %415 = vmatpush.bf16.msra.mxu0 %v406
    %416 = vmatpush.bf16.msra.mxu0 %v405
    %417 = vmatpush.bf16.msra.mxu0 %v404
    %418 = vmatpush.bf16.msra.mxu0 %v403
    %419 = vmatpush.bf16.msra.mxu0 %v402
    %420 = vmatpush.bf16.msra.mxu0 %v401
    %421 = vmatpush.bf16.msra.mxu0 %v400
    %422 = vmatpush.bf16.msra.mxu0 %v399
    %423 = vmatmul.bf16.gmra.mxu0 %v350
    %v424 = vpop.f32.mrf.mxu0
    %v425 = vadd.f32 0.0, %v424
    %v426 = vpop.f32.mrf.mxu0
    %427 = vdwg.mxu0
    %v428 = vld [vmem:[%s7] sm:$0xf]
    %v429 = vld [vmem:[%s6] sm:$0xf]
    %v430 = vld [vmem:[%s6 + $0x4] sm:$0xf]
    %v431 = vld [vmem:[%s6 + $0x8] sm:$0xf]
    %v432 = vld [vmem:[%s6 + $0xc] sm:$0xf]
    %v437 = vunpack.c.l.b16 %v429
    %v438 = vunpack.c.l.b16 %v430
    %v439 = vunpack.c.l.b16 %v431
    %v440 = vunpack.c.l.b16 %v432
    %v441 = vpack.c.b16 %v438, %v437
    %v442 = vpack.c.b16 %v440, %v439
    %vm445 = vcmask 261120
    %v447 = vsel %vm445, %v428, 0
    %449 = vmatpush.bf16.msra.mxu0 0
    %450 = vmatpush.bf16.msra.mxu0 0
    %451 = vmatpush.bf16.msra.mxu0 0
    %452 = vmatpush.bf16.msra.mxu0 0
    %453 = vmatpush.bf16.msra.mxu0 0
    %454 = vmatpush.bf16.msra.mxu0 0
    %455 = vmatpush.bf16.msra.mxu0 %v442
    %456 = vmatpush.bf16.msra.mxu0 %v441
    %457 = vmatmul.bf16.gmra.mxu0 %v447
    %v458 = vpop.f32.mrf.mxu0
    %v459 = vadd.f32 0.0, %v458
    %v460 = vpop.f32.mrf.mxu0
    %461 = vdwg.mxu0
    %v462 = vmul.f32 %v459, 0.125
    %v463 = vmul.f32 %v462, %v462
    %v464 = vmul.f32 %v462, %v463
    %v465 = vmul.f32 %v464, 0.044715
    %v466 = vadd.f32 %v462, %v465
    %v467 = vmul.f32 %v466, 0.7978846
    %v468 = vtanh.pop %v467
    %v469 = vadd.f32 %v468, 1.0
    %v470 = vmul.f32 %v469, 0.5
    %v471 = vmul.f32 %v462, %v470
    %v472 = vpack.c.bf16 %v471, %v471
    %v473 = vld [vmem:[%s8] sm:$0xf]
    %v474 = vld [vmem:[%s8 + $0x4] sm:$0xf]
    %v475 = vld [vmem:[%s8 + $0x8] sm:$0xf]
    %v476 = vld [vmem:[%s8 + $0xc] sm:$0xf]
    %v477 = vld [vmem:[%s8 + $0x10] sm:$0xf]
    %v478 = vld [vmem:[%s8 + $0x14] sm:$0xf]
    %v479 = vld [vmem:[%s8 + $0x18] sm:$0xf]
    %v480 = vld [vmem:[%s8 + $0x1c] sm:$0xf]
    %v481 = vld [vmem:[%s8 + $0x20] sm:$0xf]
    %v482 = vld [vmem:[%s8 + $0x24] sm:$0xf]
    %v483 = vld [vmem:[%s8 + $0x28] sm:$0xf]
    %v484 = vld [vmem:[%s8 + $0x2c] sm:$0xf]
    %v485 = vld [vmem:[%s8 + $0x30] sm:$0xf]
    %v486 = vld [vmem:[%s8 + $0x34] sm:$0xf]
    %v487 = vld [vmem:[%s8 + $0x38] sm:$0xf]
    %v488 = vld [vmem:[%s8 + $0x3c] sm:$0xf]
    %v505 = vunpack.c.l.b16 %v473
    %v506 = vunpack.c.l.b16 %v474
    %v507 = vunpack.c.l.b16 %v475
    %v508 = vunpack.c.l.b16 %v476
    %v509 = vunpack.c.l.b16 %v477
    %v510 = vunpack.c.l.b16 %v478
    %v511 = vunpack.c.l.b16 %v479
    %v512 = vunpack.c.l.b16 %v480
    %v513 = vunpack.c.l.b16 %v481
    %v514 = vunpack.c.l.b16 %v482
    %v515 = vunpack.c.l.b16 %v483
    %v516 = vunpack.c.l.b16 %v484
    %v517 = vunpack.c.l.b16 %v485
    %v518 = vunpack.c.l.b16 %v486
    %v519 = vunpack.c.l.b16 %v487
    %v520 = vunpack.c.l.b16 %v488
    %v521 = vpack.c.b16 %v506, %v505
    %v522 = vpack.c.b16 %v508, %v507
    %v523 = vpack.c.b16 %v510, %v509
    %v524 = vpack.c.b16 %v512, %v511
    %v525 = vpack.c.b16 %v514, %v513
    %v526 = vpack.c.b16 %v516, %v515
    %v527 = vpack.c.b16 %v518, %v517
    %v528 = vpack.c.b16 %v520, %v519
    %537 = vmatpush.bf16.msra.mxu0 %v528
    %538 = vmatpush.bf16.msra.mxu0 %v527
    %539 = vmatpush.bf16.msra.mxu0 %v526
    %540 = vmatpush.bf16.msra.mxu0 %v525
    %541 = vmatpush.bf16.msra.mxu0 %v524
    %542 = vmatpush.bf16.msra.mxu0 %v523
    %543 = vmatpush.bf16.msra.mxu0 %v522
    %544 = vmatpush.bf16.msra.mxu0 %v521
    %545 = vmatmul.bf16.gmra.mxu0 %v472
    %v546 = vpop.f32.mrf.mxu0
    %v547 = vadd.f32 0.0, %v546
    %v548 = vpop.f32.mrf.mxu0
    %549 = vdwg.mxu0
    %v550 = vmul.f32 %v547, %v547
    %551 = vadd.xlane.f32.xlu0 %v550
    %v552 = vpop.xlane.xlu0 %551
    %v553 = vadd.f32 %v552, 1e-12
    %v554 = vrsqrt.pop %v553
    %v555 = vmul.f32 %v554, %v553
    %v556 = vmul.f32 %v555, %v554
    %v557 = vmul.f32 0.5, %v556
    %v558 = vsub.f32 1.5, %v557
    %v559 = vmul.f32 %v554, %v558
    %vm560 = vweird.f32 %v553
    %vm561 = vweird.f32 %v554
    %vm562 = vmor %vm560, %vm561
    %v563 = vsel %vm562, %v554, %v559
    %v564 = vmul.f32 %v547, %v563
    %v565 = vmul.f32 %v425, %v425
    %566 = vadd.xlane.f32.xlu0 %v565
    %v567 = vpop.xlane.xlu0 %566
    %v568 = vadd.f32 %v567, 1e-12
    %v569 = vrsqrt.pop %v568
    %v570 = vmul.f32 %v569, %v568
    %v571 = vmul.f32 %v570, %v569
    %v572 = vmul.f32 0.5, %v571
    %v573 = vsub.f32 1.5, %v572
    %v574 = vmul.f32 %v569, %v573
    %vm575 = vweird.f32 %v568
    %vm576 = vweird.f32 %v569
    %vm577 = vmor %vm575, %vm576
    %v578 = vsel %vm577, %v569, %v574
    %v579 = vmul.f32 %v425, %v578
    %s580 = sld [smem:[#allocation2]]
    %581 = vmatpush.xpose.msra.mxu0 0.0
    %582 = vmatpush.xpose.msra.mxu0 0.0
    %583 = vmatpush.xpose.msra.mxu0 0.0
    %584 = vmatpush.xpose.msra.mxu0 0.0
    %585 = vmatpush.xpose.msra.mxu0 0.0
    %586 = vmatpush.xpose.msra.mxu0 0.0
    %587 = vmatpush.xpose.msra.mxu0 0.0
    %588 = vmatpush.xpose.msra.mxu0 0.0
    %589 = vmatpush.xpose.msra.mxu0 0.0
    %590 = vmatpush.xpose.msra.mxu0 0.0
    %591 = vmatpush.xpose.msra.mxu0 0.0
    %592 = vmatpush.xpose.msra.mxu0 0.0
    %593 = vmatpush.xpose.msra.mxu0 0.0
    %594 = vmatpush.xpose.msra.mxu0 0.0
    %595 = vmatpush.xpose.msra.mxu0 0.0
    %596 = vmatpush.xpose.msra.mxu0 %v579
    %597 = vmatmul.f32.gmra.mxu0 %v564
    %v598 = vpop.f32.mrf.mxu0
    %v599 = vadd.f32 0.0, %v598
    %600 = vdwg.mxu0
    %v601 = vstv %s580
    %v602 = vmul.f32 %v601, %v599
    %v603 = vld [vmem:[%s9] sm:$0xff]
    %v604 = vld [vmem:[%s10] sm:$0x1]
    %v605 = vsub.f32 %v604, 1.0
    %v606 = vmul.f32 %v605, 1e+30
    %v608 = vperm.slane %v606, 0
    %v610 = vadd.f32 %v602, %v608
    %vm611 = vcmask 64512
    %v612 = vsel %vm611, %v610, -inf
    %613 = vmax.xlane.f32.xlu0 %v612
    %v614 = vpop.xlane.xlu0 %613
    %v615 = vsub.f32 %v610, %v614
    %v616 = vmul.f32 %v615, 1.442695
    %v617 = vpow.pop %v616
    %v618 = vsel %vm611, %v617, 0.0
    %619 = vadd.xlane.f32.xlu0 %v618
    %v620 = vpop.xlane.xlu0 %619
    %v621 = vlog2.pop %v620
    %v622 = vmul.f32 %v621, 0.6931472
    %v623 = vadd.f32 %v614, %v622
    %v624 = vsub.f32 %v603, 1.0
    %v625 = vmul.f32 %v624, 1e+30
    %627 = vset.pattern.permute.xlu0 0
    %628 = vperm.xlu0 %627, %v625
    %v629 = vpop.permute.xlu0 %628
    %v631 = vadd.f32 %v602, %v629
    %v632 = vsel %vm611, %v631, -inf
    %v633 = vrot.slane %v632, 4
    %v634 = vmax.f32 %v632, %v633
    %v635 = vrot.slane %v634, 2
    %v636 = vmax.f32 %v634, %v635
    %v637 = vrot.slane %v636, 1
    %v638 = vmax.f32 %v636, %v637
    %v639 = vsub.f32 %v631, %v638
    %v640 = vmul.f32 %v639, 1.442695
    %v641 = vpow.pop %v640
    %v642 = vsel %vm611, %v641, 0.0
    %v643 = vrot.slane %v642, 4
    %v644 = vadd.f32 %v642, %v643
    %v645 = vrot.slane %v644, 2
    %v646 = vadd.f32 %v644, %v645
    %v647 = vrot.slane %v646, 1
    %v648 = vadd.f32 %v646, %v647
    %v649 = vlog2.pop %v648
    %v650 = vmul.f32 %v649, 0.6931472
    %v651 = vadd.f32 %v638, %v650
    %v652 = vmul.f32 %v564, %v579
    %653 = vadd.xlane.f32.xlu0 %v652
    %v654 = vpop.xlane.xlu0 %653
    %v655 = vmul.f32 %v601, %v654
    %v656 = vmul.f32 %v603, %v623
    %vm657 = vcmask 7168
    %v658 = vsel %vm657, %v656, 0.0
    %659 = vadd.xlane.f32.xlu0 %v658
    %v660 = vpop.xlane.xlu0 %659
    %v661 = vrot.slane %v660, 4
    %v662 = vadd.f32 %v660, %v661
    %v663 = vrot.slane %v662, 2
    %v664 = vadd.f32 %v662, %v663
    %v665 = vrot.slane %v664, 1
    %v666 = vadd.f32 %v664, %v665
    %s667 = vtos %v666
    %v668 = vmul.f32 %v604, %v651
    %vm669 = vcmask 57344
    %v670 = vsel %vm669, %v668, 0.0
    %671 = vadd.xlane.f32.xlu0 %v670
    %v672 = vpop.xlane.xlu0 %671
    %v673 = vrot.slane %v672, 4
    %v674 = vadd.f32 %v672, %v673
    %v675 = vrot.slane %v674, 2
    %v676 = vadd.f32 %v674, %v675
    %v677 = vrot.slane %v676, 1
    %v678 = vadd.f32 %v676, %v677
    %s679 = vtos %v678
    %s680 = sadd.f32 %s667, %s679
    %v681 = vmul.f32 %v603, %v655
    %v682 = vsel %vm657, %v681, 0.0
    %683 = vadd.xlane.f32.xlu0 %v682
    %v684 = vpop.xlane.xlu0 %683
    %v685 = vrot.slane %v684, 4
    %v686 = vadd.f32 %v684, %v685
    %v687 = vrot.slane %v686, 2
    %v688 = vadd.f32 %v686, %v687
    %v689 = vrot.slane %v688, 1
    %v690 = vadd.f32 %v688, %v689
    %s691 = vtos %v690
    %s692 = smul.f32 %s691, 2.0
    %s693 = ssub.f32 %s680, %s692
    %s694 = smul.f32 %s693, 0.125
    %s695 = scalar_lea.smem [#allocation3], 0
    %696 = sst [smem:[%s695]] %s694
    // Predicated region
    $region46: #{clip_wrapper_forward.1} parent=1 // pred_check
      _
    $region47: #{clip_wrapper_forward.1} parent=1 // pred_check_branch
      %698 = sbr.rel (0) target = $region49
    $region48: #{clip_wrapper_forward.1} parent=1 // pred_region
      %700 = vsyncadd [#allocation4], 0
      %s702 = sshll.u32 %s11, 4
      %s703 = int_to_ptr.hbm [resolvable:$true] %s702
      %705 = dma.smem_to_hbm [#allocation3], 16, %s703, [#allocation4]
    $region49: #{clip_wrapper_forward.1} parent=1 // pred_fallthru
      _
    // Predicated region
    $region50: #{clip_wrapper_forward.1} parent=1 // pred_check
      _
    $region51: #{clip_wrapper_forward.1} parent=1 // pred_check_branch
      %707 = sbr.rel (0) target = $region53
    $region52: #{clip_wrapper_forward.1} parent=1 // pred_region
      %709 = dma.done [#allocation4], 16
    $region53: #{clip_wrapper_forward.1} parent=1 // pred_fallthru
      _
    %710 = sfence
    %711 = vsyncpa [#allocation4], 1

</llo_original>
